<compile_context>
chip_gen: v7x
topology: tpu7x:2x2x1
jax: 0.10.0
libtpu: 0.0.40
codegen_flags: <defaults>
</compile_context>

<pallas_src>
import functools

import jax
import jax.numpy as jnp
from jax.experimental import pallas as pl
from jax.experimental.pallas import tpu as pltpu


# ---------------------------------------------------------------------------
# Kernel
# ---------------------------------------------------------------------------
def _ace_loss_kernel(logits_ref, counts_ref, contrib_ref, acc_ref, *,
                     t_total, t_real, tile_t, needs_t_mask):
    """Grid = (B-blocks [parallel], T-tiles [arbitrary / reduction])."""
    ti = pl.program_id(1)

    @pl.when(ti == 0)
    def _():
        acc_ref[...] = jnp.zeros_like(acc_ref)

    # (tile_t, tile_b, C).  Cast in-kernel so bf16 inputs halve HBM traffic
    # while exp / accumulation stay in f32 (required on v5e: no bf16 VPU/EUP).
    x = logits_ref[...].astype(jnp.float32)

    if needs_t_mask:  # static: only emitted when tile_t does not divide T
        row = jax.lax.broadcasted_iota(jnp.int32, x.shape, 0)
        valid = (ti * tile_t + row) < t_real
        x = jnp.where(valid, x, 0.0)          # keep exp well-defined on padding

    m = jnp.max(x, axis=-1, keepdims=True)
    e = jnp.exp(x - m)
    s = jnp.sum(e, axis=-1, keepdims=True)
    # One reciprocal per row + a cheap vmul instead of a divide per element.
    p = e * pl.reciprocal(s, approx=False)

    if needs_t_mask:
        p = jnp.where(valid, p, 0.0)          # exclude padded rows from the sum

    acc_ref[...] += jnp.sum(p, axis=0)        # accumulate over T

    @pl.when(ti == pl.num_programs(1) - 1)
    def _():
        inv_t = 1.0 / t_total
        probs = acc_ref[...] * inv_t                         # (tile_b, C)
        tgt = counts_ref[...].astype(jnp.float32) * inv_t
        contrib_ref[...] = jnp.log(probs) * tgt              # per-element term


# ---------------------------------------------------------------------------
# Plain-JAX glue: class-count matrix (pad_sequence + one_hot + smoothing + sum)
# Jit-compatible: no Python int() of traced values.
# ---------------------------------------------------------------------------
def _build_target_counts(targets, target_lengths, T, B, C, alpha):
    tl = target_lengths.astype(jnp.int32)
    n = targets.shape[0]
    ends = jnp.cumsum(tl)                                             # (B,)
    batch_ids = jnp.searchsorted(ends, jnp.arange(n, dtype=jnp.int32),
                                 side="right")                        # (N,)
    flat = batch_ids.astype(jnp.int32) * C + targets.astype(jnp.int32)
    counts = jnp.zeros((B * C,), jnp.float32).at[flat].add(1.0 - alpha)
    counts = counts.reshape(B, C)
    if alpha != 0.0:
        # PyTorch applies smoothing to all Lmax padded positions before summing.
        l_max = jnp.max(tl).astype(jnp.float32)
        counts = counts + (alpha / C) * l_max
    counts = counts.at[:, 0].set(jnp.asarray(T, jnp.float32)
                                 - tl.astype(jnp.float32))
    return counts


# ---------------------------------------------------------------------------
# Tiling heuristics
# ---------------------------------------------------------------------------
def _choose_tile_b(B):
    if B <= 8:
        return B
    for tb in (32, 24, 16, 8):                 # multiple-of-8 divisors of B
        if B % tb == 0:
            return tb
    return B                                   # full batch (full dim allowed)


def _choose_tile_t(T, tile_b, C, itemsize, budget_bytes):
    """Size the time tile so 2 double-buffered logits tiles fit the budget."""
    b_pad = ((tile_b + 15) // 16) * 16         # covers bf16 sublane packing too
    c_pad = ((C + 127) // 128) * 128
    per_row = b_pad * c_pad * max(int(itemsize), 2)
    tt = max(1, budget_bytes // (2 * per_row))
    if tt >= T:
        return T
    if tt >= 8:
        tt = (tt // 8) * 8
    return max(1, min(tt, T))


# ---------------------------------------------------------------------------
# Wrapper
# ---------------------------------------------------------------------------
def ace_loss(logits, targets, input_lengths, target_lengths, alpha=0.0,
             tile_t=None, tile_b=None, vmem_budget_bytes=20 * 1024 * 1024):
    # input_lengths is accepted but unused, matching the PyTorch module.
    T, B, C = logits.shape
    counts = _build_target_counts(targets, target_lengths, T, B, C, alpha)

    if tile_b is None:
        tile_b = _choose_tile_b(B)
    assert B % tile_b == 0, "tile_b must divide B"
    itemsize = jnp.dtype(logits.dtype).itemsize
    if tile_t is None:
        tile_t = _choose_tile_t(T, tile_b, C, itemsize, vmem_budget_bytes)
    tile_t = min(tile_t, T)

    num_b = B // tile_b
    num_t = pl.cdiv(T, tile_t)
    needs_t_mask = (T % tile_t) != 0

    # Explicit VMEM limit: default budget keeps this at 32 MiB — above v5e's
    # 16 MiB scoped default (so the bigger double-buffered tiles are accepted)
    # and safely below v7x's 64 MiB physical per-TC VMEM.
    b_pad = ((tile_b + 15) // 16) * 16
    c_pad = ((C + 127) // 128) * 128
    logits_tile_bytes = tile_t * b_pad * c_pad * max(int(itemsize), 2)
    small_bytes = 6 * b_pad * c_pad * 4        # counts + output + scratch (f32)
    vmem_needed = 2 * logits_tile_bytes + small_bytes + (1 << 20)
    vmem_limit = int(max(vmem_needed, 32 << 20))

    kernel = functools.partial(
        _ace_loss_kernel,
        t_total=float(T), t_real=T, tile_t=tile_t, needs_t_mask=needs_t_mask)

    contrib = pl.pallas_call(
        kernel,
        out_shape=jax.ShapeDtypeStruct((B, C), jnp.float32),
        grid_spec=pltpu.PrefetchScalarGridSpec(
            num_scalar_prefetch=0,
            grid=(num_b, num_t),
            in_specs=[
                pl.BlockSpec((tile_t, tile_b, C), lambda bi, ti: (ti, bi, 0)),
                pl.BlockSpec((tile_b, C), lambda bi, ti: (bi, 0)),
            ],
            out_specs=pl.BlockSpec((tile_b, C), lambda bi, ti: (bi, 0)),
            scratch_shapes=[pltpu.VMEM((tile_b, C), jnp.float32)],
        ),
        compiler_params=pltpu.CompilerParams(
            dimension_semantics=("parallel", "arbitrary"),
            vmem_limit_bytes=vmem_limit),
    )(logits, counts)

    return -jnp.sum(contrib) / B


# ---------------------------------------------------------------------------
# Pure-JAX reference mirroring the PyTorch forward exactly.
# ---------------------------------------------------------------------------
def ace_loss_reference(logits, targets, input_lengths, target_lengths, alpha=0.0):
    T, B, C = logits.shape
    counts = _build_target_counts(targets, target_lengths, T, B, C, alpha)
    probs = jax.nn.softmax(logits.astype(jnp.float32), axis=2)
    probs = jnp.sum(probs, axis=0) / T
    counts = counts / T
    return -jnp.sum(jnp.log(probs) * counts) / B


if __name__ == "__main__":
    key = jax.random.PRNGKey(0)
    T, B, C = 16, 4, 32

    k1, k2 = jax.random.split(key)
    logits = jax.random.normal(k1, (T, B, C), dtype=jnp.float32)

    target_lengths = jnp.array([3, 5, 2, 4], dtype=jnp.int32)
    input_lengths = jnp.full((B,), T, dtype=jnp.int32)       # unused by the loss
    total_targets = 3 + 5 + 2 + 4
    targets = jax.random.randint(k2, (total_targets,), 1, C, dtype=jnp.int32)

    # f32 path under jit (counts builder is jit-compatible)
    loss_fn = jax.jit(functools.partial(ace_loss, alpha=0.0))
    out = jax.block_until_ready(
        loss_fn(logits, targets, input_lengths, target_lengths))
    ref = jax.block_until_ready(
        ace_loss_reference(logits, targets, input_lengths, target_lengths, alpha=0.0))
    assert jnp.allclose(out, ref, rtol=1e-5, atol=1e-5), (out, ref)

    # bf16 input path (halves HBM traffic; compute stays f32 in-kernel)
    logits_bf16 = logits.astype(jnp.bfloat16)
    out_bf16 = jax.block_until_ready(
        ace_loss(logits_bf16, targets, input_lengths, target_lengths, alpha=0.0))
    ref_bf16 = jax.block_until_ready(
        ace_loss_reference(logits_bf16.astype(jnp.float32), targets,
                           input_lengths, target_lengths, alpha=0.0))
    assert jnp.allclose(out_bf16, ref_bf16, rtol=1e-4, atol=1e-4), (out_bf16, ref_bf16)

    print("KERNEL_OK")
</pallas_src>

<mosaic_0001>
module attributes {stable_mosaic.version = 11 : i64} {
  func.func @_ace_loss_kernel(%arg0: i32, %arg1: i32, %arg2: memref<16x4x32xf32, #tpu.memory_space<vmem>>, %arg3: memref<4x32xf32, #tpu.memory_space<vmem>>, %arg4: memref<4x32xf32, #tpu.memory_space<vmem>>, %arg5: memref<4x32xf32, #tpu.memory_space<vmem>>) attributes {dimension_semantics = [#tpu.dimension_semantics<parallel>, #tpu.dimension_semantics<arbitrary>], iteration_bounds = array<i64: 1, 1>, scalar_prefetch = 0 : i64, scratch_operands = 1 : i64, tpu.core_type = #tpu.core_type<tc>, window_params = [{transform_indices = @transform_0, window_bounds = array<i64: 16, 4, 32>}, {transform_indices = @transform_1, window_bounds = array<i64: 4, 32>}, {transform_indices = @transform_2, window_bounds = array<i64: 4, 32>}]} {
    %c0_i32 = arith.constant 0 : i32
    %0 = arith.cmpi eq, %arg1, %c0_i32 : i32
    %1 = arith.extui %0 : i1 to i32
    %c0_i32_0 = arith.constant 0 : i32
    %2 = arith.cmpi ne, %1, %c0_i32_0 : i32
    scf.if %2 {
      %cst_11 = arith.constant 0.000000e+00 : f32
      %21 = vector.broadcast %cst_11 : f32 to vector<4x32xf32>
      %c0_12 = arith.constant 0 : index
      %c0_13 = arith.constant 0 : index
      %22 = vector.load %arg5[%c0_12, %c0_13] : memref<4x32xf32, #tpu.memory_space<vmem>>, vector<4x32xf32>
      tpu.vector_store %arg5[%c0_12, %c0_13], %21 {strides = array<i32>} : memref<4x32xf32, #tpu.memory_space<vmem>>, vector<4x32xf32>,
    } else {
    }
    %c0 = arith.constant 0 : index
    %c0_1 = arith.constant 0 : index
    %c0_2 = arith.constant 0 : index
    %3 = vector.load %arg2[%c0, %c0_1, %c0_2] : memref<16x4x32xf32, #tpu.memory_space<vmem>>, vector<16x4x32xf32>
    %cst = arith.constant dense<0xFF800000> : vector<16x4xf32>
    %4 = vector.multi_reduction <maximumf>, %3, %cst [2] : vector<16x4x32xf32> to vector<16x4xf32>
    %5 = vector.shape_cast %4 : vector<16x4xf32> to vector<16x4x1xf32>
    %6 = vector.broadcast %5 : vector<16x4x1xf32> to vector<16x4x32xf32>
    %7 = arith.subf %3, %6 : vector<16x4x32xf32>
    %8 = math.exp %7 : vector<16x4x32xf32>
    %cst_3 = arith.constant dense<0.000000e+00> : vector<16x4xf32>
    %9 = vector.multi_reduction <add>, %8, %cst_3 [2] : vector<16x4x32xf32> to vector<16x4xf32>
    %10 = vector.shape_cast %9 : vector<16x4xf32> to vector<16x4x1xf32>
    %11 = tpu.reciprocal %10 : vector<16x4x1xf32> -> vector<16x4x1xf32>
    %12 = vector.broadcast %11 : vector<16x4x1xf32> to vector<16x4x32xf32>
    %13 = arith.mulf %8, %12 : vector<16x4x32xf32>
    %c0_4 = arith.constant 0 : index
    %c0_5 = arith.constant 0 : index
    %14 = vector.load %arg5[%c0_4, %c0_5] : memref<4x32xf32, #tpu.memory_space<vmem>>, vector<4x32xf32>
    %cst_6 = arith.constant dense<0.000000e+00> : vector<4x32xf32>
    %15 = vector.multi_reduction <add>, %13, %cst_6 [0] : vector<16x4x32xf32> to vector<4x32xf32>
    %16 = arith.addf %14, %15 : vector<4x32xf32>
    %c0_7 = arith.constant 0 : index
    %c0_8 = arith.constant 0 : index
    %17 = vector.load %arg5[%c0_7, %c0_8] : memref<4x32xf32, #tpu.memory_space<vmem>>, vector<4x32xf32>
    tpu.vector_store %arg5[%c0_7, %c0_8], %16 {strides = array<i32>} : memref<4x32xf32, #tpu.memory_space<vmem>>, vector<4x32xf32>,
    %c0_i32_9 = arith.constant 0 : i32
    %18 = arith.cmpi eq, %arg1, %c0_i32_9 : i32
    %19 = arith.extui %18 : i1 to i32
    %c0_i32_10 = arith.constant 0 : i32
    %20 = arith.cmpi ne, %19, %c0_i32_10 : i32
    scf.if %20 {
      %c0_11 = arith.constant 0 : index
      %c0_12 = arith.constant 0 : index
      %21 = vector.load %arg5[%c0_11, %c0_12] : memref<4x32xf32, #tpu.memory_space<vmem>>, vector<4x32xf32>
      %cst_13 = arith.constant 6.250000e-02 : f32
      %22 = vector.broadcast %cst_13 : f32 to vector<4x32xf32>
      %23 = arith.mulf %21, %22 : vector<4x32xf32>
      %c0_14 = arith.constant 0 : index
      %c0_15 = arith.constant 0 : index
      %24 = vector.load %arg3[%c0_14, %c0_15] : memref<4x32xf32, #tpu.memory_space<vmem>>, vector<4x32xf32>
      %cst_16 = arith.constant 6.250000e-02 : f32
      %25 = vector.broadcast %cst_16 : f32 to vector<4x32xf32>
      %26 = arith.mulf %24, %25 : vector<4x32xf32>
      %27 = math.log %23 : vector<4x32xf32>
      %28 = arith.mulf %27, %26 : vector<4x32xf32>
      %c0_17 = arith.constant 0 : index
      %c0_18 = arith.constant 0 : index
      %29 = vector.load %arg4[%c0_17, %c0_18] : memref<4x32xf32, #tpu.memory_space<vmem>>, vector<4x32xf32>
      tpu.vector_store %arg4[%c0_17, %c0_18], %28 {strides = array<i32>} : memref<4x32xf32, #tpu.memory_space<vmem>>, vector<4x32xf32>,
    } else {
    }
    return
  }
  func.func @transform_0(%arg0: i32, %arg1: i32) -> (i32, i32, i32) {
    %c0_i32 = arith.constant 0 : i32
    %c0_i32_0 = arith.constant 0 : i32
    return %arg1, %arg0, %c0_i32 : i32, i32, i32
  }
  func.func @transform_1(%arg0: i32, %arg1: i32) -> (i32, i32) {
    %c0_i32 = arith.constant 0 : i32
    %c0_i32_0 = arith.constant 0 : i32
    return %arg0, %c0_i32 : i32, i32
  }
  func.func @transform_2(%arg0: i32, %arg1: i32) -> (i32, i32) {
    %c0_i32 = arith.constant 0 : i32
    %c0_i32_0 = arith.constant 0 : i32
    return %arg0, %c0_i32 : i32, i32
  }
}

</mosaic_0001>

<llo_original>
// kernel: custom-call
$region0: #{custom-call}
  %s0 = inlined_call_operand.vmem [shape: u32[14], index: 0, kind: output, shape index: {}]

// kernel: ace_loss.1
$region0: #{ace_loss.1}
  #allocation0 [shape = 'u32[]', space=smem, size = 0x4, offset = 0x4, fixed_abs, tag = 'smem constant byte address 0x4 - core index']
  #allocation1 [shape = 'u32[144,128]{1,0:T(1,128)}', space=vmem, size = 0x12000, scoped, tag = 'internal scratch']
  #allocation2 [shape = 'f32[4,32]{1,0:T(4,128)}', space=vmem, size = 0x800, scoped, tag = 'scratch operand']
  %s0 = inlined_call_operand.vmem [shape: f32[16,4,32], index: 0, kind: input, shape index: {}]
  %s1 = inlined_call_operand.vmem [shape: f32[4,32], index: 1, kind: input, shape index: {}]
  %s2 = inlined_call_operand.vmem [shape: f32[4,32], index: 2, kind: output, shape index: {}]
  %s3 = sld [smem:[#allocation0]]
  $region26: #{ace_loss.1} parent=0
    _
  %s5 = ssub.s32 1, %s3
  %s6 = scalar_select 0, %s5, %s3
  // Predicated region
  $region2: #{ace_loss.1} parent=0 // pred_check
    _
  $region3: #{ace_loss.1} parent=0 // pred_check_branch
    %8 = sbr.rel (0) target = $region5
  $region4: #{ace_loss.1} parent=0 // pred_region
    _
  $region5: #{ace_loss.1} parent=0 // pred_fallthru
    _
  // Predicated region
  $region6: #{ace_loss.1} parent=0 // pred_check
    _
  $region7: #{ace_loss.1} parent=0 // pred_check_branch
    %10 = sbr.rel (0) target = $region9
  $region8: #{ace_loss.1} parent=0 // pred_region
    _
  $region9: #{ace_loss.1} parent=0 // pred_fallthru
    _
  %p11 = scmp.eq.s32.totalorder 0, 0
  // Predicated region
  $region10: #{ace_loss.1} parent=0 // pred_check
    %p12 = pneg %p11
  $region11: #{ace_loss.1} parent=0 // pred_check_branch
    %14 = sbr.rel (%p12) target = $region13
  $region12: #{ace_loss.1} parent=0 // pred_region
    %vm15 = vcmask 257024
    %16 = vst.msk [vmem:[#allocation2] sm:$0xf] %vm15, 0.0
  $region13: #{ace_loss.1} parent=0 // pred_fallthru
    _
  %v17 = vld [vmem:[%s0] sm:$0xf]
  %v18 = vld [vmem:[%s0 + $0x4] sm:$0xf]
  %v19 = vld [vmem:[%s0 + $0x8] sm:$0xf]
  %v20 = vld [vmem:[%s0 + $0xc] sm:$0xf]
  %v21 = vld [vmem:[%s0 + $0x10] sm:$0xf]
  %v22 = vld [vmem:[%s0 + $0x14] sm:$0xf]
  %v23 = vld [vmem:[%s0 + $0x18] sm:$0xf]
  %v24 = vld [vmem:[%s0 + $0x1c] sm:$0xf]
  %v25 = vld [vmem:[%s0 + $0x20] sm:$0xf]
  %v26 = vld [vmem:[%s0 + $0x24] sm:$0xf]
  %v27 = vld [vmem:[%s0 + $0x28] sm:$0xf]
  %v28 = vld [vmem:[%s0 + $0x2c] sm:$0xf]
  %v29 = vld [vmem:[%s0 + $0x30] sm:$0xf]
  %v30 = vld [vmem:[%s0 + $0x34] sm:$0xf]
  %v31 = vld [vmem:[%s0 + $0x38] sm:$0xf]
  %v32 = vld [vmem:[%s0 + $0x3c] sm:$0xf]
  %vm33 = vcmask 257024
  %v34 = vsel %vm33, %v17, -inf
  %35 = vmax.xlane.f32.xlu0 %v34
  %v36 = vpop.xlane.xlu0 %35
  %v37 = vsel %vm33, %v18, -inf
  %38 = vmax.xlane.f32.xlu0 %v37
  %v39 = vpop.xlane.xlu0 %38
  %v40 = vsel %vm33, %v19, -inf
  %41 = vmax.xlane.f32.xlu0 %v40
  %v42 = vpop.xlane.xlu0 %41
  %v43 = vsel %vm33, %v20, -inf
  %44 = vmax.xlane.f32.xlu0 %v43
  %v45 = vpop.xlane.xlu0 %44
  %v46 = vsel %vm33, %v21, -inf
  %47 = vmax.xlane.f32.xlu0 %v46
  %v48 = vpop.xlane.xlu0 %47
  %v49 = vsel %vm33, %v22, -inf
  %50 = vmax.xlane.f32.xlu0 %v49
  %v51 = vpop.xlane.xlu0 %50
  %v52 = vsel %vm33, %v23, -inf
  %53 = vmax.xlane.f32.xlu0 %v52
  %v54 = vpop.xlane.xlu0 %53
  %v55 = vsel %vm33, %v24, -inf
  %56 = vmax.xlane.f32.xlu0 %v55
  %v57 = vpop.xlane.xlu0 %56
  %v58 = vsel %vm33, %v25, -inf
  %59 = vmax.xlane.f32.xlu0 %v58
  %v60 = vpop.xlane.xlu0 %59
  %v61 = vsel %vm33, %v26, -inf
  %62 = vmax.xlane.f32.xlu0 %v61
  %v63 = vpop.xlane.xlu0 %62
  %v64 = vsel %vm33, %v27, -inf
  %65 = vmax.xlane.f32.xlu0 %v64
  %v66 = vpop.xlane.xlu0 %65
  %v67 = vsel %vm33, %v28, -inf
  %68 = vmax.xlane.f32.xlu0 %v67
  %v69 = vpop.xlane.xlu0 %68
  %v70 = vsel %vm33, %v29, -inf
  %71 = vmax.xlane.f32.xlu0 %v70
  %v72 = vpop.xlane.xlu0 %71
  %v73 = vsel %vm33, %v30, -inf
  %74 = vmax.xlane.f32.xlu0 %v73
  %v75 = vpop.xlane.xlu0 %74
  %v76 = vsel %vm33, %v31, -inf
  %77 = vmax.xlane.f32.xlu0 %v76
  %v78 = vpop.xlane.xlu0 %77
  %v79 = vsel %vm33, %v32, -inf
  %80 = vmax.xlane.f32.xlu0 %v79
  %v81 = vpop.xlane.xlu0 %80
  %v82 = vsub.f32 %v17, %v36
  %v83 = vsub.f32 %v18, %v39
  %v84 = vsub.f32 %v19, %v42
  %v85 = vsub.f32 %v20, %v45
  %v86 = vsub.f32 %v21, %v48
  %v87 = vsub.f32 %v22, %v51
  %v88 = vsub.f32 %v23, %v54
  %v89 = vsub.f32 %v24, %v57
  %v90 = vsub.f32 %v25, %v60
  %v91 = vsub.f32 %v26, %v63
  %v92 = vsub.f32 %v27, %v66
  %v93 = vsub.f32 %v28, %v69
  %v94 = vsub.f32 %v29, %v72
  %v95 = vsub.f32 %v30, %v75
  %v96 = vsub.f32 %v31, %v78
  %v97 = vsub.f32 %v32, %v81
  %v98 = vmul.f32 %v82, 1.442695
  %v99 = vpow.pop %v98
  %v100 = vmul.f32 %v83, 1.442695
  %v101 = vpow.pop %v100
  %v102 = vmul.f32 %v84, 1.442695
  %v103 = vpow.pop %v102
  %v104 = vmul.f32 %v85, 1.442695
  %v105 = vpow.pop %v104
  %v106 = vmul.f32 %v86, 1.442695
  %v107 = vpow.pop %v106
  %v108 = vmul.f32 %v87, 1.442695
  %v109 = vpow.pop %v108
  %v110 = vmul.f32 %v88, 1.442695
  %v111 = vpow.pop %v110
  %v112 = vmul.f32 %v89, 1.442695
  %v113 = vpow.pop %v112
  %v114 = vmul.f32 %v90, 1.442695
  %v115 = vpow.pop %v114
  %v116 = vmul.f32 %v91, 1.442695
  %v117 = vpow.pop %v116
  %v118 = vmul.f32 %v92, 1.442695
  %v119 = vpow.pop %v118
  %v120 = vmul.f32 %v93, 1.442695
  %v121 = vpow.pop %v120
  %v122 = vmul.f32 %v94, 1.442695
  %v123 = vpow.pop %v122
  %v124 = vmul.f32 %v95, 1.442695
  %v125 = vpow.pop %v124
  %v126 = vmul.f32 %v96, 1.442695
  %v127 = vpow.pop %v126
  %v128 = vmul.f32 %v97, 1.442695
  %v129 = vpow.pop %v128
  %v130 = vsel %vm33, %v99, 0.0
  %131 = vadd.xlane.f32.xlu0 %v130
  %v132 = vpop.xlane.xlu0 %131
  %v133 = vsel %vm33, %v101, 0.0
  %134 = vadd.xlane.f32.xlu0 %v133
  %v135 = vpop.xlane.xlu0 %134
  %v136 = vsel %vm33, %v103, 0.0
  %137 = vadd.xlane.f32.xlu0 %v136
  %v138 = vpop.xlane.xlu0 %137
  %v139 = vsel %vm33, %v105, 0.0
  %140 = vadd.xlane.f32.xlu0 %v139
  %v141 = vpop.xlane.xlu0 %140
  %v142 = vsel %vm33, %v107, 0.0
  %143 = vadd.xlane.f32.xlu0 %v142
  %v144 = vpop.xlane.xlu0 %143
  %v145 = vsel %vm33, %v109, 0.0
  %146 = vadd.xlane.f32.xlu0 %v145
  %v147 = vpop.xlane.xlu0 %146
  %v148 = vsel %vm33, %v111, 0.0
  %149 = vadd.xlane.f32.xlu0 %v148
  %v150 = vpop.xlane.xlu0 %149
  %v151 = vsel %vm33, %v113, 0.0
  %152 = vadd.xlane.f32.xlu0 %v151
  %v153 = vpop.xlane.xlu0 %152
  %v154 = vsel %vm33, %v115, 0.0
  %155 = vadd.xlane.f32.xlu0 %v154
  %v156 = vpop.xlane.xlu0 %155
  %v157 = vsel %vm33, %v117, 0.0
  %158 = vadd.xlane.f32.xlu0 %v157
  %v159 = vpop.xlane.xlu0 %158
  %v160 = vsel %vm33, %v119, 0.0
  %161 = vadd.xlane.f32.xlu0 %v160
  %v162 = vpop.xlane.xlu0 %161
  %v163 = vsel %vm33, %v121, 0.0
  %164 = vadd.xlane.f32.xlu0 %v163
  %v165 = vpop.xlane.xlu0 %164
  %v166 = vsel %vm33, %v123, 0.0
  %167 = vadd.xlane.f32.xlu0 %v166
  %v168 = vpop.xlane.xlu0 %167
  %v169 = vsel %vm33, %v125, 0.0
  %170 = vadd.xlane.f32.xlu0 %v169
  %v171 = vpop.xlane.xlu0 %170
  %v172 = vsel %vm33, %v127, 0.0
  %173 = vadd.xlane.f32.xlu0 %v172
  %v174 = vpop.xlane.xlu0 %173
  %v175 = vsel %vm33, %v129, 0.0
  %176 = vadd.xlane.f32.xlu0 %v175
  %v177 = vpop.xlane.xlu0 %176
  %v178 = vrcp.pop %v132
  %v179 = vrcp.pop %v135
  %v180 = vrcp.pop %v138
  %v181 = vrcp.pop %v141
  %v182 = vrcp.pop %v144
  %v183 = vrcp.pop %v147
  %v184 = vrcp.pop %v150
  %v185 = vrcp.pop %v153
  %v186 = vrcp.pop %v156
  %v187 = vrcp.pop %v159
  %v188 = vrcp.pop %v162
  %v189 = vrcp.pop %v165
  %v190 = vrcp.pop %v168
  %v191 = vrcp.pop %v171
  %v192 = vrcp.pop %v174
  %v193 = vrcp.pop %v177
  %v194 = vmul.f32 %v99, %v178
  %v195 = vmul.f32 %v101, %v179
  %v196 = vmul.f32 %v103, %v180
  %v197 = vmul.f32 %v105, %v181
  %v198 = vmul.f32 %v107, %v182
  %v199 = vmul.f32 %v109, %v183
  %v200 = vmul.f32 %v111, %v184
  %v201 = vmul.f32 %v113, %v185
  %v202 = vmul.f32 %v115, %v186
  %v203 = vmul.f32 %v117, %v187
  %v204 = vmul.f32 %v119, %v188
  %v205 = vmul.f32 %v121, %v189
  %v206 = vmul.f32 %v123, %v190
  %v207 = vmul.f32 %v125, %v191
  %v208 = vmul.f32 %v127, %v192
  %v209 = vmul.f32 %v129, %v193
  %v210 = vld [vmem:[#allocation2] sm:$0xf]
  %v211 = vsel %vm33, %v194, 0.0
  %v212 = vsel %vm33, %v195, 0.0
  %v213 = vadd.f32 %v211, %v212
  %v214 = vsel %vm33, %v196, 0.0
  %v215 = vadd.f32 %v213, %v214
  %v216 = vsel %vm33, %v197, 0.0
  %v217 = vadd.f32 %v215, %v216
  %v218 = vsel %vm33, %v198, 0.0
  %v219 = vadd.f32 %v217, %v218
  %v220 = vsel %vm33, %v199, 0.0
  %v221 = vadd.f32 %v219, %v220
  %v222 = vsel %vm33, %v200, 0.0
  %v223 = vadd.f32 %v221, %v222
  %v224 = vsel %vm33, %v201, 0.0
  %v225 = vadd.f32 %v223, %v224
  %v226 = vsel %vm33, %v202, 0.0
  %v227 = vadd.f32 %v225, %v226
  %v228 = vsel %vm33, %v203, 0.0
  %v229 = vadd.f32 %v227, %v228
  %v230 = vsel %vm33, %v204, 0.0
  %v231 = vadd.f32 %v229, %v230
  %v232 = vsel %vm33, %v205, 0.0
  %v233 = vadd.f32 %v231, %v232
  %v234 = vsel %vm33, %v206, 0.0
  %v235 = vadd.f32 %v233, %v234
  %v236 = vsel %vm33, %v207, 0.0
  %v237 = vadd.f32 %v235, %v236
  %v238 = vsel %vm33, %v208, 0.0
  %v239 = vadd.f32 %v237, %v238
  %v240 = vsel %vm33, %v209, 0.0
  %v241 = vadd.f32 %v239, %v240
  %v242 = vadd.f32 %v210, %v241
  %243 = vst.msk [vmem:[#allocation2] sm:$0xf] %vm33, %v242
  // Predicated region
  $region14: #{ace_loss.1} parent=0 // pred_check
    %p244 = pneg %p11
  $region15: #{ace_loss.1} parent=0 // pred_check_branch
    %246 = sbr.rel (%p244) target = $region17
  $region16: #{ace_loss.1} parent=0 // pred_region
    %v247 = vld [vmem:[#allocation2] sm:$0xf]
    %v248 = vmul.f32 %v247, 0.0625
    %v249 = vld [vmem:[%s1] sm:$0xf]
    %v250 = vmul.f32 %v249, 0.0625
    %v251 = vlog2.pop %v248
    %v252 = vmul.f32 %v251, 0.6931472
    %v253 = vmul.f32 %v252, %v250
    %254 = vst.msk [vmem:[%s2] sm:$0xf] %vm33, %v253
  $region17: #{ace_loss.1} parent=0 // pred_fallthru
    _
  // Predicated region
  $region18: #{ace_loss.1} parent=0 // pred_check
    _
  $region19: #{ace_loss.1} parent=0 // pred_check_branch
    %256 = sbr.rel (0) target = $region21
  $region20: #{ace_loss.1} parent=0 // pred_region
    _
  $region21: #{ace_loss.1} parent=0 // pred_fallthru
    _
  // Predicated region
  $region22: #{ace_loss.1} parent=0 // pred_check
    _
  $region23: #{ace_loss.1} parent=0 // pred_check_branch
    %258 = sbr.rel (0) target = $region25
  $region24: #{ace_loss.1} parent=0 // pred_region
    _
  $region25: #{ace_loss.1} parent=0 // pred_fallthru
    _

</llo_original>
